<compile_context>
chip_gen: v7x
topology: tpu7x:2x2x1
jax: 0.10.0
libtpu: 0.0.40
codegen_flags: <defaults>
</compile_context>

<pallas_src>
import jax
import jax.numpy as jnp
from jax.experimental import pallas as pl
from jax.experimental.pallas import tpu as pltpu

_EPS = 1e-5


def _round_up(n, m):
    return ((n + m - 1) // m) * m


def nn_kernel(xT_ref, w1t_ref, c1_ref, w2t_ref, c2_ref, w3t_ref, c3_ref, o_ref):
    # Feature-major: xT is (6, TB), batch on the lane axis.
    xT = xT_ref[...]

    # Layer 1: folded Linear(6,32)+BN(32), then ReLU     -> (32, TB)
    h = jnp.dot(w1t_ref[...], xT, preferred_element_type=jnp.float32) + c1_ref[...]
    h = jnp.maximum(h, 0.0)

    # Layer 2: folded Linear(32,8)+BN(8), then ReLU      -> (8, TB)
    h = jnp.dot(w2t_ref[...], h, preferred_element_type=jnp.float32) + c2_ref[...]
    h = jnp.maximum(h, 0.0)

    # Layer 3: Linear(8,3) + softmax over the 3 classes  -> (3, TB)
    logits = jnp.dot(w3t_ref[...], h, preferred_element_type=jnp.float32) + c3_ref[...]
    m = jnp.max(logits, axis=0, keepdims=True)
    e = jnp.exp(logits - m)
    denom = jnp.sum(e, axis=0, keepdims=True)
    # Exact reciprocal: softmax rows sum to 1 at f32 precision.
    o_ref[...] = e * (1.0 / denom)


def nn_forward(x, kparams, *, tb=65536):
    """x: (B, 6) float32. Returns (B, 3) softmax probabilities."""
    (w1t, c1, w2t, c2, w3t, c3) = kparams
    B = x.shape[0]

    # Pad the batch only to a lane multiple (128), NOT to the tile size.
    b_pad = _round_up(B, 128)
    if b_pad != B:
        x = jnp.pad(x, ((0, b_pad - B), (0, 0)))
    xT = jnp.transpose(x)                      # (6, b_pad): batch on lanes

    # Batch tile: multiple of 128, clamped to the padded batch.
    tb = max(128, _round_up(min(tb, b_pad), 128))
    # Keep >= 2 grid steps when possible so v7x can shard the parallel axis
    # across both TensorCores.
    if b_pad >= 256 and pl.cdiv(b_pad, tb) < 2:
        tb = _round_up(pl.cdiv(b_pad, 2), 128)
    grid = (pl.cdiv(b_pad, tb),)

    def resident(shape):
        return pl.BlockSpec(shape, lambda i: (0, 0))

    flops = 2 * (6 * 32 + 32 * 8 + 8 * 3) * b_pad
    cost = pl.CostEstimate(
        flops=flops,
        transcendentals=3 * b_pad,
        bytes_accessed=(6 + 3) * 4 * b_pad,
    )

    out = pl.pallas_call(
        nn_kernel,
        out_shape=jax.ShapeDtypeStruct((3, b_pad), jnp.float32),
        grid=grid,
        in_specs=[
            pl.BlockSpec((6, tb), lambda i: (0, i)),   # x tile, pipelined
            resident(w1t.shape), resident(c1.shape),
            resident(w2t.shape), resident(c2.shape),
            resident(w3t.shape), resident(c3.shape),
        ],
        out_specs=pl.BlockSpec((3, tb), lambda i: (0, i)),  # lane-dense store
        compiler_params=pltpu.CompilerParams(
            dimension_semantics=("parallel",),
            vmem_limit_bytes=32 * 1024 * 1024),
        cost_estimate=cost,
    )(xT, w1t, c1, w2t, c2, w3t, c3)

    return jnp.transpose(out)[:B]              # back to (B, 3)


def make_raw_params():
    """PyTorch-style parameters (Linear weights as (in,out); BN running stats)."""
    key = jax.random.PRNGKey(0)
    ks = jax.random.split(key, 14)
    w1 = jax.random.normal(ks[0], (6, 32), jnp.float32) / jnp.sqrt(6.0)
    b1 = jax.random.normal(ks[1], (32,), jnp.float32) * 0.05
    w2 = jax.random.normal(ks[2], (32, 8), jnp.float32) / jnp.sqrt(32.0)
    b2 = jax.random.normal(ks[3], (8,), jnp.float32) * 0.05
    w3 = jax.random.normal(ks[4], (8, 3), jnp.float32) / jnp.sqrt(8.0)
    b3 = jax.random.normal(ks[5], (3,), jnp.float32) * 0.05
    # BatchNorm1d eval-mode params (non-trivial to exercise the folding).
    g1 = 1.0 + 0.1 * jax.random.normal(ks[6], (32,), jnp.float32)
    be1 = 0.1 * jax.random.normal(ks[7], (32,), jnp.float32)
    m1 = 0.1 * jax.random.normal(ks[8], (32,), jnp.float32)
    v1 = 1.0 + 0.1 * jax.nn.softplus(jax.random.normal(ks[9], (32,), jnp.float32))
    g2 = 1.0 + 0.1 * jax.random.normal(ks[10], (8,), jnp.float32)
    be2 = 0.1 * jax.random.normal(ks[11], (8,), jnp.float32)
    m2 = 0.1 * jax.random.normal(ks[12], (8,), jnp.float32)
    v2 = 1.0 + 0.1 * jax.nn.softplus(jax.random.normal(ks[13], (8,), jnp.float32))
    return (w1, b1, g1, be1, m1, v1, w2, b2, g2, be2, m2, v2, w3, b3)


def fold_params(raw):
    """Fold bias + BN(eval) into weights; transpose for the feature-major kernel."""
    (w1, b1, g1, be1, m1, v1, w2, b2, g2, be2, m2, v2, w3, b3) = raw
    s1 = g1 / jnp.sqrt(v1 + _EPS)
    t1 = be1 - m1 * s1
    s2 = g2 / jnp.sqrt(v2 + _EPS)
    t2 = be2 - m2 * s2
    # relu((x@W + b)*s + t) == relu(x @ (W*s) + (b*s + t))
    w1f = w1 * s1[None, :]
    c1 = b1 * s1 + t1
    w2f = w2 * s2[None, :]
    c2 = b2 * s2 + t2
    return (jnp.transpose(w1f), c1[:, None],
            jnp.transpose(w2f), c2[:, None],
            jnp.transpose(w3), b3[:, None])


def reference_forward(x, raw):
    """Un-folded, batch-major reference matching PyTorch eval-mode forward."""
    (w1, b1, g1, be1, m1, v1, w2, b2, g2, be2, m2, v2, w3, b3) = raw
    h = x @ w1 + b1
    h = (h - m1) / jnp.sqrt(v1 + _EPS) * g1 + be1      # Dropout = identity (eval)
    h = jnp.maximum(h, 0.0)
    h = h @ w2 + b2
    h = (h - m2) / jnp.sqrt(v2 + _EPS) * g2 + be2
    h = jnp.maximum(h, 0.0)
    logits = h @ w3 + b3
    return jax.nn.softmax(logits, axis=1)


if __name__ == "__main__":
    # TODO(synk): Dropout(0.1) in training mode (random masking) has no
    # deterministic equivalent here; eval-mode (identity) semantics are used.
    key = jax.random.PRNGKey(0)
    B = 8
    x = jax.random.normal(key, (B, 6), jnp.float32)

    raw = make_raw_params()
    kparams = fold_params(raw)

    out = nn_forward(x, kparams)
    out = jax.block_until_ready(out)

    ref = reference_forward(x, raw)
    assert out.shape == (B, 3)
    assert jnp.allclose(out, ref, atol=1e-4, rtol=1e-4)
    assert jnp.allclose(jnp.sum(out, axis=1), jnp.ones((B,)), atol=1e-5)

    print("KERNEL_OK")
</pallas_src>

<mosaic_0001>
module attributes {stable_mosaic.version = 11 : i64} {
  func.func @nn_kernel(%arg0: i32, %arg1: memref<6x128xf32, #tpu.memory_space<vmem>>, %arg2: memref<32x6xf32, #tpu.memory_space<vmem>>, %arg3: memref<32x1xf32, #tpu.memory_space<vmem>>, %arg4: memref<8x32xf32, #tpu.memory_space<vmem>>, %arg5: memref<8x1xf32, #tpu.memory_space<vmem>>, %arg6: memref<3x8xf32, #tpu.memory_space<vmem>>, %arg7: memref<3x1xf32, #tpu.memory_space<vmem>>, %arg8: memref<3x128xf32, #tpu.memory_space<vmem>>) attributes {dimension_semantics = [#tpu.dimension_semantics<parallel>], iteration_bounds = array<i64: 1>, scalar_prefetch = 0 : i64, scratch_operands = 0 : i64, tpu.core_type = #tpu.core_type<tc>, window_params = [{transform_indices = @transform_0, window_bounds = array<i64: 6, 128>}, {pipeline_mode = #tpu.pipeline_mode<synchronous>, transform_indices = @transform_1, window_bounds = array<i64: 32, 6>}, {pipeline_mode = #tpu.pipeline_mode<synchronous>, transform_indices = @transform_2, window_bounds = array<i64: 32, 1>}, {pipeline_mode = #tpu.pipeline_mode<synchronous>, transform_indices = @transform_3, window_bounds = array<i64: 8, 32>}, {pipeline_mode = #tpu.pipeline_mode<synchronous>, transform_indices = @transform_4, window_bounds = array<i64: 8, 1>}, {pipeline_mode = #tpu.pipeline_mode<synchronous>, transform_indices = @transform_5, window_bounds = array<i64: 3, 8>}, {pipeline_mode = #tpu.pipeline_mode<synchronous>, transform_indices = @transform_6, window_bounds = array<i64: 3, 1>}, {transform_indices = @transform_7, window_bounds = array<i64: 3, 128>}]} {
    %c0 = arith.constant 0 : index
    %c0_0 = arith.constant 0 : index
    %0 = vector.load %arg1[%c0, %c0_0] : memref<6x128xf32, #tpu.memory_space<vmem>>, vector<6x128xf32>
    %c0_1 = arith.constant 0 : index
    %c0_2 = arith.constant 0 : index
    %1 = vector.load %arg2[%c0_1, %c0_2] : memref<32x6xf32, #tpu.memory_space<vmem>>, vector<32x6xf32>
    %cst = arith.constant dense<0.000000e+00> : vector<32x128xf32>
    %2 = tpu.matmul %1, %0, %cst {dimension_numbers = #tpu.dot_dimension_numbers<[1], [0], [0], [1], [0, 0, 1, 1], [], []>} : vector<32x6xf32>, vector<6x128xf32>, vector<32x128xf32> -> vector<32x128xf32>
    %c0_3 = arith.constant 0 : index
    %c0_4 = arith.constant 0 : index
    %3 = vector.load %arg3[%c0_3, %c0_4] : memref<32x1xf32, #tpu.memory_space<vmem>>, vector<32x1xf32>
    %4 = vector.broadcast %3 : vector<32x1xf32> to vector<32x128xf32>
    %5 = arith.addf %2, %4 : vector<32x128xf32>
    %cst_5 = arith.constant 0.000000e+00 : f32
    %6 = vector.broadcast %cst_5 : f32 to vector<32x128xf32>
    %7 = arith.maximumf %5, %6 : vector<32x128xf32>
    %c0_6 = arith.constant 0 : index
    %c0_7 = arith.constant 0 : index
    %8 = vector.load %arg4[%c0_6, %c0_7] : memref<8x32xf32, #tpu.memory_space<vmem>>, vector<8x32xf32>
    %cst_8 = arith.constant dense<0.000000e+00> : vector<8x128xf32>
    %9 = tpu.matmul %8, %7, %cst_8 {dimension_numbers = #tpu.dot_dimension_numbers<[1], [0], [0], [1], [0, 0, 1, 1], [], []>} : vector<8x32xf32>, vector<32x128xf32>, vector<8x128xf32> -> vector<8x128xf32>
    %c0_9 = arith.constant 0 : index
    %c0_10 = arith.constant 0 : index
    %10 = vector.load %arg5[%c0_9, %c0_10] : memref<8x1xf32, #tpu.memory_space<vmem>>, vector<8x1xf32>
    %11 = vector.broadcast %10 : vector<8x1xf32> to vector<8x128xf32>
    %12 = arith.addf %9, %11 : vector<8x128xf32>
    %cst_11 = arith.constant 0.000000e+00 : f32
    %13 = vector.broadcast %cst_11 : f32 to vector<8x128xf32>
    %14 = arith.maximumf %12, %13 : vector<8x128xf32>
    %c0_12 = arith.constant 0 : index
    %c0_13 = arith.constant 0 : index
    %15 = vector.load %arg6[%c0_12, %c0_13] : memref<3x8xf32, #tpu.memory_space<vmem>>, vector<3x8xf32>
    %cst_14 = arith.constant dense<0.000000e+00> : vector<3x128xf32>
    %16 = tpu.matmul %15, %14, %cst_14 {dimension_numbers = #tpu.dot_dimension_numbers<[1], [0], [0], [1], [0, 0, 1, 1], [], []>} : vector<3x8xf32>, vector<8x128xf32>, vector<3x128xf32> -> vector<3x128xf32>
    %c0_15 = arith.constant 0 : index
    %c0_16 = arith.constant 0 : index
    %17 = vector.load %arg7[%c0_15, %c0_16] : memref<3x1xf32, #tpu.memory_space<vmem>>, vector<3x1xf32>
    %18 = vector.broadcast %17 : vector<3x1xf32> to vector<3x128xf32>
    %19 = arith.addf %16, %18 : vector<3x128xf32>
    %cst_17 = arith.constant dense<0xFF800000> : vector<128xf32>
    %20 = vector.multi_reduction <maximumf>, %19, %cst_17 [0] : vector<3x128xf32> to vector<128xf32>
    %21 = vector.shape_cast %20 : vector<128xf32> to vector<1x128xf32>
    %22 = vector.broadcast %21 : vector<1x128xf32> to vector<3x128xf32>
    %23 = arith.subf %19, %22 : vector<3x128xf32>
    %24 = math.exp %23 : vector<3x128xf32>
    %cst_18 = arith.constant dense<0.000000e+00> : vector<128xf32>
    %25 = vector.multi_reduction <add>, %24, %cst_18 [0] : vector<3x128xf32> to vector<128xf32>
    %26 = vector.shape_cast %25 : vector<128xf32> to vector<1x128xf32>
    %cst_19 = arith.constant 1.000000e+00 : f32
    %27 = vector.broadcast %cst_19 : f32 to vector<1x128xf32>
    %28 = arith.divf %27, %26 : vector<1x128xf32>
    %29 = vector.broadcast %28 : vector<1x128xf32> to vector<3x128xf32>
    %30 = arith.mulf %24, %29 : vector<3x128xf32>
    %c0_20 = arith.constant 0 : index
    %c0_21 = arith.constant 0 : index
    %31 = vector.load %arg8[%c0_20, %c0_21] : memref<3x128xf32, #tpu.memory_space<vmem>>, vector<3x128xf32>
    tpu.vector_store %arg8[%c0_20, %c0_21], %30 {strides = array<i32>} : memref<3x128xf32, #tpu.memory_space<vmem>>, vector<3x128xf32>,
    return
  }
  func.func @transform_0(%arg0: i32) -> (i32, i32) {
    %c0_i32 = arith.constant 0 : i32
    %c0_i32_0 = arith.constant 0 : i32
    return %c0_i32, %arg0 : i32, i32
  }
  func.func @transform_1(%arg0: i32) -> (i32, i32) {
    %c0_i32 = arith.constant 0 : i32
    %c0_i32_0 = arith.constant 0 : i32
    %c0_i32_1 = arith.constant 0 : i32
    return %c0_i32, %c0_i32_0 : i32, i32
  }
  func.func @transform_2(%arg0: i32) -> (i32, i32) {
    %c0_i32 = arith.constant 0 : i32
    %c0_i32_0 = arith.constant 0 : i32
    %c0_i32_1 = arith.constant 0 : i32
    return %c0_i32, %c0_i32_0 : i32, i32
  }
  func.func @transform_3(%arg0: i32) -> (i32, i32) {
    %c0_i32 = arith.constant 0 : i32
    %c0_i32_0 = arith.constant 0 : i32
    %c0_i32_1 = arith.constant 0 : i32
    return %c0_i32, %c0_i32_0 : i32, i32
  }
  func.func @transform_4(%arg0: i32) -> (i32, i32) {
    %c0_i32 = arith.constant 0 : i32
    %c0_i32_0 = arith.constant 0 : i32
    %c0_i32_1 = arith.constant 0 : i32
    return %c0_i32, %c0_i32_0 : i32, i32
  }
  func.func @transform_5(%arg0: i32) -> (i32, i32) {
    %c0_i32 = arith.constant 0 : i32
    %c0_i32_0 = arith.constant 0 : i32
    %c0_i32_1 = arith.constant 0 : i32
    return %c0_i32, %c0_i32_0 : i32, i32
  }
  func.func @transform_6(%arg0: i32) -> (i32, i32) {
    %c0_i32 = arith.constant 0 : i32
    %c0_i32_0 = arith.constant 0 : i32
    %c0_i32_1 = arith.constant 0 : i32
    return %c0_i32, %c0_i32_0 : i32, i32
  }
  func.func @transform_7(%arg0: i32) -> (i32, i32) {
    %c0_i32 = arith.constant 0 : i32
    %c0_i32_0 = arith.constant 0 : i32
    return %c0_i32, %arg0 : i32, i32
  }
}

</mosaic_0001>

<llo_original>
// kernel: tpu_custom_call.1
$region0: #{tpu_custom_call.1}
  #allocation0 [shape = 'u32[]', space=smem, size = 0x4, offset = 0x4, fixed_abs, tag = 'smem constant byte address 0x4 - core index']
  #allocation1 [shape = 'u32[144,128]{1,0:T(1,128)}', space=vmem, size = 0x12000, scoped, tag = 'internal scratch']
  %s0 = inlined_call_operand.vmem [shape: f32[6,128], index: 0, kind: input, shape index: {}]
  %s1 = inlined_call_operand.vmem [shape: f32[32,6], index: 1, kind: input, shape index: {}]
  %s2 = inlined_call_operand.vmem [shape: f32[32,1], index: 2, kind: input, shape index: {}]
  %s3 = inlined_call_operand.vmem [shape: f32[8,32], index: 3, kind: input, shape index: {}]
  %s4 = inlined_call_operand.vmem [shape: f32[8,1], index: 4, kind: input, shape index: {}]
  %s5 = inlined_call_operand.vmem [shape: f32[3,8], index: 5, kind: input, shape index: {}]
  %s6 = inlined_call_operand.vmem [shape: f32[3,1], index: 6, kind: input, shape index: {}]
  %s7 = inlined_call_operand.hbm [shape: f32[3,128], index: 7, kind: output, shape index: {}]
  %s8 = sld [smem:[#allocation0]]
  $region38: #{tpu_custom_call.1} parent=0
    _
  %s10 = ssub.s32 1, %s8
  %s11 = scalar_select 0, %s10, %s8
  $region1: #{tpu_custom_call.1} parent=0
    #allocation2 [shape = 'u8[2048]{0}', space=vmem, size = 0x800, scoped, tag = 'output window, operand 0, single buffered']
    #allocation3 [shape = 's32[1]{0}', space=sflag, size = 0x4, scoped, tag = 'scoped memory for tpu_custom_call.1']
    %12 = vsyncpa [#allocation3], 0
    // Predicated region
    $region2: #{tpu_custom_call.1} parent=1 // pred_check
      _
    $region3: #{tpu_custom_call.1} parent=1 // pred_check_branch
      %14 = sbr.rel (0) target = $region5
    $region4: #{tpu_custom_call.1} parent=1 // pred_region
      _
    $region5: #{tpu_custom_call.1} parent=1 // pred_fallthru
      _
    // Predicated region
    $region6: #{tpu_custom_call.1} parent=1 // pred_check
      _
    $region7: #{tpu_custom_call.1} parent=1 // pred_check_branch
      %16 = sbr.rel (0) target = $region9
    $region8: #{tpu_custom_call.1} parent=1 // pred_region
      _
    $region9: #{tpu_custom_call.1} parent=1 // pred_fallthru
      _
    // Predicated region
    $region10: #{tpu_custom_call.1} parent=1 // pred_check
      _
    $region11: #{tpu_custom_call.1} parent=1 // pred_check_branch
      %18 = sbr.rel (0) target = $region13
    $region12: #{tpu_custom_call.1} parent=1 // pred_region
      _
    $region13: #{tpu_custom_call.1} parent=1 // pred_fallthru
      _
    // Predicated region
    $region14: #{tpu_custom_call.1} parent=1 // pred_check
      _
    $region15: #{tpu_custom_call.1} parent=1 // pred_check_branch
      %20 = sbr.rel (0) target = $region17
    $region16: #{tpu_custom_call.1} parent=1 // pred_region
      _
    $region17: #{tpu_custom_call.1} parent=1 // pred_fallthru
      _
    // Predicated region
    $region18: #{tpu_custom_call.1} parent=1 // pred_check
      _
    $region19: #{tpu_custom_call.1} parent=1 // pred_check_branch
      %22 = sbr.rel (0) target = $region21
    $region20: #{tpu_custom_call.1} parent=1 // pred_region
      _
    $region21: #{tpu_custom_call.1} parent=1 // pred_fallthru
      _
    // Predicated region
    $region22: #{tpu_custom_call.1} parent=1 // pred_check
      _
    $region23: #{tpu_custom_call.1} parent=1 // pred_check_branch
      %24 = sbr.rel (0) target = $region25
    $region24: #{tpu_custom_call.1} parent=1 // pred_region
      _
    $region25: #{tpu_custom_call.1} parent=1 // pred_fallthru
      _
    // Predicated region
    $region26: #{tpu_custom_call.1} parent=1 // pred_check
      _
    $region27: #{tpu_custom_call.1} parent=1 // pred_check_branch
      %26 = sbr.rel (0) target = $region29
    $region28: #{tpu_custom_call.1} parent=1 // pred_region
      _
    $region29: #{tpu_custom_call.1} parent=1 // pred_fallthru
      _
    %v27 = vld [vmem:[%s0] sm:$0x3f]
    %v28 = vld [vmem:[%s1] sm:$0xff]
    %v29 = vld [vmem:[%s1 + $0x8] sm:$0xff]
    %v30 = vld [vmem:[%s1 + $0x10] sm:$0xff]
    %v31 = vld [vmem:[%s1 + $0x18] sm:$0xff]
    %v32 = vld [vmem:[%s2] sm:$0xff]
    %v33 = vld [vmem:[%s2 + $0x8] sm:$0xff]
    %v34 = vld [vmem:[%s2 + $0x10] sm:$0xff]
    %v35 = vld [vmem:[%s2 + $0x18] sm:$0xff]
    %37 = vset.pattern.permute.xlu0 0
    %38 = vperm.xlu0 %37, %v32
    %v39 = vpop.permute.xlu0 %38
    %42 = vset.pattern.permute.xlu0 0
    %43 = vperm.xlu0 %42, %v33
    %v44 = vpop.permute.xlu0 %43
    %47 = vset.pattern.permute.xlu0 0
    %48 = vperm.xlu0 %47, %v34
    %v49 = vpop.permute.xlu0 %48
    %52 = vset.pattern.permute.xlu0 0
    %53 = vperm.xlu0 %52, %v35
    %v54 = vpop.permute.xlu0 %53
    %vm56 = vcmask 48128
    %v58 = vsel %vm56, %v28, 0
    %v61 = vsel %vm56, %v29, 0
    %v64 = vsel %vm56, %v30, 0
    %v67 = vsel %vm56, %v31, 0
    %vm69 = vcmask 1045504
    %v71 = vsel %vm69, %v27, 0
    %73 = vmatprep.subr.mxu0 0.0
    %74 = vmatpush1.msra.mxu0 %v71
    %75 = vmatprep.subr.mxu0 0.0
    %76 = vmatpush1.msra.mxu0 0.0
    %77 = vmatprep.subr.mxu0 0.0
    %78 = vmatpush1.msra.mxu0 0.0
    %79 = vmatprep.subr.mxu0 0.0
    %80 = vmatpush1.msra.mxu0 0.0
    %81 = vmatprep.subr.mxu0 0.0
    %82 = vmatpush1.msra.mxu0 0.0
    %83 = vmatprep.subr.mxu0 0.0
    %84 = vmatpush1.msra.mxu0 0.0
    %85 = vmatprep.subr.mxu0 0.0
    %86 = vmatpush1.msra.mxu0 0.0
    %87 = vmatprep.subr.mxu0 0.0
    %88 = vmatpush1.msra.mxu0 0.0
    %89 = vmatprep.subr.mxu0 0.0
    %90 = vmatpush1.msra.mxu0 0.0
    %91 = vmatprep.subr.mxu0 0.0
    %92 = vmatpush1.msra.mxu0 0.0
    %93 = vmatprep.subr.mxu0 0.0
    %94 = vmatpush1.msra.mxu0 0.0
    %95 = vmatprep.subr.mxu0 0.0
    %96 = vmatpush1.msra.mxu0 0.0
    %97 = vmatprep.subr.mxu0 0.0
    %98 = vmatpush1.msra.mxu0 0.0
    %99 = vmatprep.subr.mxu0 0.0
    %100 = vmatpush1.msra.mxu0 0.0
    %101 = vmatprep.subr.mxu0 0.0
    %102 = vmatpush1.msra.mxu0 0.0
    %103 = vmatprep.subr.mxu0 0.0
    %104 = vmatpush1.msra.mxu0 0.0
    %105 = vmatprep.subr.mxu0 0.0
    %106 = vmatpush1.msra.mxu0 0.0
    %107 = vmatprep.subr.mxu0 0.0
    %108 = vmatpush1.msra.mxu0 0.0
    %109 = vmatprep.subr.mxu0 0.0
    %110 = vmatpush1.msra.mxu0 0.0
    %111 = vmatprep.subr.mxu0 0.0
    %112 = vmatpush1.msra.mxu0 0.0
    %113 = vmatprep.subr.mxu0 0.0
    %114 = vmatpush1.msra.mxu0 0.0
    %115 = vmatprep.subr.mxu0 0.0
    %116 = vmatpush1.msra.mxu0 0.0
    %117 = vmatprep.subr.mxu0 0.0
    %118 = vmatpush1.msra.mxu0 0.0
    %119 = vmatprep.subr.mxu0 0.0
    %120 = vmatpush1.msra.mxu0 0.0
    %121 = vmatprep.subr.mxu0 0.0
    %122 = vmatpush1.msra.mxu0 0.0
    %123 = vmatprep.subr.mxu0 0.0
    %124 = vmatpush1.msra.mxu0 0.0
    %125 = vmatprep.subr.mxu0 0.0
    %126 = vmatpush1.msra.mxu0 0.0
    %127 = vmatprep.subr.mxu0 0.0
    %128 = vmatpush1.msra.mxu0 0.0
    %129 = vmatprep.subr.mxu0 0.0
    %130 = vmatpush1.msra.mxu0 0.0
    %131 = vmatprep.subr.mxu0 0.0
    %132 = vmatpush1.msra.mxu0 0.0
    %133 = vmatprep.subr.mxu0 0.0
    %134 = vmatpush1.msra.mxu0 0.0
    %135 = vmatprep.subr.mxu0 0.0
    %136 = vmatpush1.msra.mxu0 0.0
    %137 = vmatprep.mubr.f32.mxu0 0.0
    %138 = vmatmul.mubr.f32.gmra.mrb[0].mxu0 %v58
    %v139 = vpop.f32.mrb[0].mxu0
    %v140 = vadd.f32 %v39, %v139
    %v141 = vpop.f32.mrb[0].mxu0
    %142 = vmatprep.mubr.f32.mxu0 0.0
    %143 = vmatmul.mubr.f32.gmra.mrb[0].mxu0 %v61
    %v144 = vpop.f32.mrb[0].mxu0
    %v145 = vadd.f32 %v44, %v144
    %v146 = vpop.f32.mrb[0].mxu0
    %147 = vmatprep.mubr.f32.mxu0 0.0
    %148 = vmatmul.mubr.f32.gmra.mrb[0].mxu0 %v64
    %v149 = vpop.f32.mrb[0].mxu0
    %v150 = vadd.f32 %v49, %v149
    %v151 = vpop.f32.mrb[0].mxu0
    %152 = vmatprep.mubr.f32.mxu0 0.0
    %153 = vmatmul.mubr.f32.gmra.mrb[0].mxu0 %v67
    %v154 = vpop.f32.mrb[0].mxu0
    %v155 = vadd.f32 %v54, %v154
    %v156 = vpop.f32.mrb[0].mxu0
    %157 = vdwg.mxu0
    %v158 = vmax.f32 %v140, 0.0
    %v159 = vmax.f32 %v145, 0.0
    %v160 = vmax.f32 %v150, 0.0
    %v161 = vmax.f32 %v155, 0.0
    %v162 = vld [vmem:[%s3] sm:$0xff]
    %v163 = vld [vmem:[%s4] sm:$0xff]
    %165 = vset.pattern.permute.xlu0 0
    %166 = vperm.xlu0 %165, %v163
    %v167 = vpop.permute.xlu0 %166
    %vm169 = vcmask 261120
    %v171 = vsel %vm169, %v162, 0
    %173 = vmatprep.subr.mxu0 0.0
    %174 = vmatpush1.msra.mxu0 %v158
    %175 = vmatprep.subr.mxu0 0.0
    %176 = vmatpush1.msra.mxu0 %v159
    %177 = vmatprep.subr.mxu0 0.0
    %178 = vmatpush1.msra.mxu0 %v160
    %179 = vmatprep.subr.mxu0 0.0
    %180 = vmatpush1.msra.mxu0 %v161
    %181 = vmatprep.subr.mxu0 0.0
    %182 = vmatpush1.msra.mxu0 0.0
    %183 = vmatprep.subr.mxu0 0.0
    %184 = vmatpush1.msra.mxu0 0.0
    %185 = vmatprep.subr.mxu0 0.0
    %186 = vmatpush1.msra.mxu0 0.0
    %187 = vmatprep.subr.mxu0 0.0
    %188 = vmatpush1.msra.mxu0 0.0
    %189 = vmatprep.subr.mxu0 0.0
    %190 = vmatpush1.msra.mxu0 0.0
    %191 = vmatprep.subr.mxu0 0.0
    %192 = vmatpush1.msra.mxu0 0.0
    %193 = vmatprep.subr.mxu0 0.0
    %194 = vmatpush1.msra.mxu0 0.0
    %195 = vmatprep.subr.mxu0 0.0
    %196 = vmatpush1.msra.mxu0 0.0
    %197 = vmatprep.subr.mxu0 0.0
    %198 = vmatpush1.msra.mxu0 0.0
    %199 = vmatprep.subr.mxu0 0.0
    %200 = vmatpush1.msra.mxu0 0.0
    %201 = vmatprep.subr.mxu0 0.0
    %202 = vmatpush1.msra.mxu0 0.0
    %203 = vmatprep.subr.mxu0 0.0
    %204 = vmatpush1.msra.mxu0 0.0
    %205 = vmatprep.subr.mxu0 0.0
    %206 = vmatpush1.msra.mxu0 0.0
    %207 = vmatprep.subr.mxu0 0.0
    %208 = vmatpush1.msra.mxu0 0.0
    %209 = vmatprep.subr.mxu0 0.0
    %210 = vmatpush1.msra.mxu0 0.0
    %211 = vmatprep.subr.mxu0 0.0
    %212 = vmatpush1.msra.mxu0 0.0
    %213 = vmatprep.subr.mxu0 0.0
    %214 = vmatpush1.msra.mxu0 0.0
    %215 = vmatprep.subr.mxu0 0.0
    %216 = vmatpush1.msra.mxu0 0.0
    %217 = vmatprep.subr.mxu0 0.0
    %218 = vmatpush1.msra.mxu0 0.0
    %219 = vmatprep.subr.mxu0 0.0
    %220 = vmatpush1.msra.mxu0 0.0
    %221 = vmatprep.subr.mxu0 0.0
    %222 = vmatpush1.msra.mxu0 0.0
    %223 = vmatprep.subr.mxu0 0.0
    %224 = vmatpush1.msra.mxu0 0.0
    %225 = vmatprep.subr.mxu0 0.0
    %226 = vmatpush1.msra.mxu0 0.0
    %227 = vmatprep.subr.mxu0 0.0
    %228 = vmatpush1.msra.mxu0 0.0
    %229 = vmatprep.subr.mxu0 0.0
    %230 = vmatpush1.msra.mxu0 0.0
    %231 = vmatprep.subr.mxu0 0.0
    %232 = vmatpush1.msra.mxu0 0.0
    %233 = vmatprep.subr.mxu0 0.0
    %234 = vmatpush1.msra.mxu0 0.0
    %235 = vmatprep.subr.mxu0 0.0
    %236 = vmatpush1.msra.mxu0 0.0
    %237 = vmatprep.mubr.f32.mxu0 0.0
    %238 = vmatmul.mubr.f32.gmra.mrb[0].mxu0 %v171
    %v239 = vpop.f32.mrb[0].mxu0
    %v240 = vadd.f32 %v167, %v239
    %v241 = vpop.f32.mrb[0].mxu0
    %242 = vdwg.mxu0
    %v243 = vmax.f32 %v240, 0.0
    %v244 = vld [vmem:[%s5] sm:$0x7]
    %v245 = vld [vmem:[%s6] sm:$0x7]
    %247 = vset.pattern.permute.xlu0 0
    %248 = vperm.xlu0 %247, %v245
    %v249 = vpop.permute.xlu0 %248
    %vm251 = vcmask 64512
    %v253 = vsel %vm251, %v244, 0
    %255 = vmatprep.subr.mxu0 0.0
    %256 = vmatpush1.msra.mxu0 %v243
    %257 = vmatprep.subr.mxu0 0.0
    %258 = vmatpush1.msra.mxu0 0.0
    %259 = vmatprep.subr.mxu0 0.0
    %260 = vmatpush1.msra.mxu0 0.0
    %261 = vmatprep.subr.mxu0 0.0
    %262 = vmatpush1.msra.mxu0 0.0
    %263 = vmatprep.subr.mxu0 0.0
    %264 = vmatpush1.msra.mxu0 0.0
    %265 = vmatprep.subr.mxu0 0.0
    %266 = vmatpush1.msra.mxu0 0.0
    %267 = vmatprep.subr.mxu0 0.0
    %268 = vmatpush1.msra.mxu0 0.0
    %269 = vmatprep.subr.mxu0 0.0
    %270 = vmatpush1.msra.mxu0 0.0
    %271 = vmatprep.subr.mxu0 0.0
    %272 = vmatpush1.msra.mxu0 0.0
    %273 = vmatprep.subr.mxu0 0.0
    %274 = vmatpush1.msra.mxu0 0.0
    %275 = vmatprep.subr.mxu0 0.0
    %276 = vmatpush1.msra.mxu0 0.0
    %277 = vmatprep.subr.mxu0 0.0
    %278 = vmatpush1.msra.mxu0 0.0
    %279 = vmatprep.subr.mxu0 0.0
    %280 = vmatpush1.msra.mxu0 0.0
    %281 = vmatprep.subr.mxu0 0.0
    %282 = vmatpush1.msra.mxu0 0.0
    %283 = vmatprep.subr.mxu0 0.0
    %284 = vmatpush1.msra.mxu0 0.0
    %285 = vmatprep.subr.mxu0 0.0
    %286 = vmatpush1.msra.mxu0 0.0
    %287 = vmatprep.subr.mxu0 0.0
    %288 = vmatpush1.msra.mxu0 0.0
    %289 = vmatprep.subr.mxu0 0.0
    %290 = vmatpush1.msra.mxu0 0.0
    %291 = vmatprep.subr.mxu0 0.0
    %292 = vmatpush1.msra.mxu0 0.0
    %293 = vmatprep.subr.mxu0 0.0
    %294 = vmatpush1.msra.mxu0 0.0
    %295 = vmatprep.subr.mxu0 0.0
    %296 = vmatpush1.msra.mxu0 0.0
    %297 = vmatprep.subr.mxu0 0.0
    %298 = vmatpush1.msra.mxu0 0.0
    %299 = vmatprep.subr.mxu0 0.0
    %300 = vmatpush1.msra.mxu0 0.0
    %301 = vmatprep.subr.mxu0 0.0
    %302 = vmatpush1.msra.mxu0 0.0
    %303 = vmatprep.subr.mxu0 0.0
    %304 = vmatpush1.msra.mxu0 0.0
    %305 = vmatprep.subr.mxu0 0.0
    %306 = vmatpush1.msra.mxu0 0.0
    %307 = vmatprep.subr.mxu0 0.0
    %308 = vmatpush1.msra.mxu0 0.0
    %309 = vmatprep.subr.mxu0 0.0
    %310 = vmatpush1.msra.mxu0 0.0
    %311 = vmatprep.subr.mxu0 0.0
    %312 = vmatpush1.msra.mxu0 0.0
    %313 = vmatprep.subr.mxu0 0.0
    %314 = vmatpush1.msra.mxu0 0.0
    %315 = vmatprep.subr.mxu0 0.0
    %316 = vmatpush1.msra.mxu0 0.0
    %317 = vmatprep.subr.mxu0 0.0
    %318 = vmatpush1.msra.mxu0 0.0
    %319 = vmatprep.mubr.f32.mxu0 0.0
    %320 = vmatmul.mubr.f32.gmra.mrb[0].mxu0 %v253
    %v321 = vpop.f32.mrb[0].mxu0
    %v322 = vadd.f32 %v249, %v321
    %v323 = vpop.f32.mrb[0].mxu0
    %324 = vdwg.mxu0
    %vm325 = vcmask 1042432
    %v326 = vsel %vm325, %v322, -inf
    %v327 = vrot.slane %v326, 4
    %v328 = vmax.f32 %v326, %v327
    %v329 = vrot.slane %v328, 2
    %v330 = vmax.f32 %v328, %v329
    %v331 = vrot.slane %v330, 1
    %v332 = vmax.f32 %v330, %v331
    %v333 = vsub.f32 %v322, %v332
    %v334 = vmul.f32 %v333, 1.442695
    %v335 = vpow.pop %v334
    %v336 = vsel %vm325, %v335, 0.0
    %v337 = vrot.slane %v336, 4
    %v338 = vadd.f32 %v336, %v337
    %v339 = vrot.slane %v338, 2
    %v340 = vadd.f32 %v338, %v339
    %v341 = vrot.slane %v340, 1
    %v342 = vadd.f32 %v340, %v341
    %v343 = vrcp.pop %v342
    %v344 = vmul.f32 1.0, %v343
    %v345 = vmul.f32 %v335, %v344
    %346 = vst [vmem:[#allocation2] sm:$0x7] %v345
    // Predicated region
    $region30: #{tpu_custom_call.1} parent=1 // pred_check
      _
    $region31: #{tpu_custom_call.1} parent=1 // pred_check_branch
      %348 = sbr.rel (0) target = $region33
    $region32: #{tpu_custom_call.1} parent=1 // pred_region
      %s350 = ssub.s32 64, 64
      %351 = vsyncadd [#allocation3], %s350
      %s353 = sshll.u32 [#allocation2], 4
      %s354 = int_to_ptr.vmem [resolvable:$true] %s353
      %356 = dma.vmem_to_hbm [thread:$0]  %s354, 64, %s7, [#allocation3]
    $region33: #{tpu_custom_call.1} parent=1 // pred_fallthru
      _
    // Predicated region
    $region34: #{tpu_custom_call.1} parent=1 // pred_check
      _
    $region35: #{tpu_custom_call.1} parent=1 // pred_check_branch
      %358 = sbr.rel (0) target = $region37
    $region36: #{tpu_custom_call.1} parent=1 // pred_region
      %359 = dma.done [#allocation3], 64
    $region37: #{tpu_custom_call.1} parent=1 // pred_fallthru
      _
    %360 = vsyncpa [#allocation3], 1

</llo_original>
